<compile_context>
chip_gen: v7x
topology: tpu7x:2x2x1
jax: 0.10.0
libtpu: 0.0.40
codegen_flags: <defaults>
</compile_context>

<pallas_src>
import math
import functools

import jax
import jax.numpy as jnp
from jax import lax
from jax.experimental import pallas as pl
from jax.experimental.pallas import tpu as pltpu


def _round_up(x, m):
    return (x + m - 1) // m * m


def _vmem_budget_bytes():
    # Generation-aware cap: ~60% of per-core VMEM (=> ~77 MiB on v5e/v6e,
    # ~38 MiB on v7x). Falls back to a v7x-safe value if the query fails.
    try:
        return int(pltpu.get_tpu_info().vmem_capacity_bytes * 0.6)
    except Exception:
        return 48 * 1024 * 1024


# -----------------------------------------------------------------------------
# Kernels
# -----------------------------------------------------------------------------
def _eq_linear_kernel_single_k(x_ref, w_ref, b_ref, o_ref, *, scale):
    """Single K step: one (tm, tn) output tile, no accumulator round-trips.

    x_ref: (tm, Kp)  activations (bf16/f32)
    w_ref: (tn, Kp)  weights, PyTorch (Out, In) layout (bf16/f32)
    b_ref: (1, tn)   bias (f32)
    o_ref: (tm, tn)  output
    """
    # Contract directly on the In axis of both operands (no in-kernel transpose,
    # lane-dense output along Out).
    acc = lax.dot_general(
        x_ref[...], w_ref[...],
        dimension_numbers=(((1,), (1,)), ((), ())),
        preferred_element_type=jnp.float32)
    o_ref[...] = (acc * scale + b_ref[...]).astype(o_ref.dtype)


def _eq_linear_kernel_multi_k(x_ref, w_ref, b_ref, o_ref, *, scale):
    """Multi K step: accumulate directly into the resident f32 output tile."""
    k = pl.program_id(2)

    @pl.when(k == 0)
    def _init():
        o_ref[...] = jnp.zeros_like(o_ref)

    o_ref[...] += lax.dot_general(
        x_ref[...], w_ref[...],
        dimension_numbers=(((1,), (1,)), ((), ())),
        preferred_element_type=jnp.float32)

    @pl.when(k == pl.num_programs(2) - 1)
    def _finalize():
        # Equalized-lr scale + bias applied exactly once, in f32.
        o_ref[...] = o_ref[...] * scale + b_ref[...]


# -----------------------------------------------------------------------------
# Wrapper with one-time parameter preprocessing
# -----------------------------------------------------------------------------
class EqualizedLinearTPU:
    """EqualizedLinear forward on TPU: y = x @ (weight / sqrt(In)).T + bias."""

    def __init__(self, weight, bias=None, *, use_bf16=True,
                 tn_max=512, tk_max=2048):
        Out, In = weight.shape
        self.in_features = In
        self.out_features = Out
        self.scale = 1.0 / math.sqrt(In)
        self.compute_dtype = jnp.bfloat16 if use_bf16 else jnp.float32

        # ---- tile plan along In (K) and Out (N): fixed per layer ----
        self.tk = min(_round_up(In, 128), tk_max)
        self.Kp = _round_up(In, self.tk)
        tn = min(_round_up(Out, 128), tn_max)
        if tn >= 256:
            tn = (tn // 256) * 256  # v6e/v7x MXU is 2x256x256: keep N 256-aligned
        self.tn = tn
        self.Np = _round_up(Out, tn)

        # ---- one-time weight/bias preprocessing (amortized across calls) ----
        w = weight.astype(self.compute_dtype)
        if (self.Np, self.Kp) == (Out, In):
            wp = w
        else:
            wp = jnp.zeros((self.Np, self.Kp), self.compute_dtype)
            wp = wp.at[:Out, :In].set(w)
        # TODO(synk): bias=None variants could skip the bias operand entirely;
        # here a zero bias is DMA'd (tiny) to keep a single kernel body.
        b = jnp.zeros((Out,), jnp.float32) if bias is None else bias.astype(jnp.float32)
        if self.Np == Out:
            bp = b.reshape(1, Out)
        else:
            bp = jnp.zeros((1, self.Np), jnp.float32).at[0, :Out].set(b)
        self.wp = wp
        self.bp = bp

    def __call__(self, x, *, out_dtype=jnp.float32):
        B, In = x.shape
        assert In == self.in_features
        Out = self.out_features
        tk, Kp, Np = self.tk, self.Kp, self.Np
        tn = self.tn
        isz = jnp.dtype(self.compute_dtype).itemsize
        budget = _vmem_budget_bytes()

        # tm: cover the full padded batch whenever the VMEM budget allows so the
        # weight streams from HBM exactly once (weight traffic = (Mp/tm) * |W|).
        fixed = 2 * tn * tk * isz + 2 * tn * 4            # weight + bias buffers
        per_row = 2 * tk * isz + 2 * tn * 4               # x + output per batch row
        tm_cap = max(8, (budget - fixed) // per_row // 8 * 8)
        tm = min(_round_up(B, 8), tm_cap, 4096)
        Mp = _round_up(B, tm)

        # v7x has 2 TensorCores: make sure the parallel (i, j) grid has >= 2
        # blocks (halving tn keeps Np % tn == 0 and tn a 128-multiple).
        if (Mp // tm) * (Np // tn) == 1 and tn >= 256:
            tn //= 2

        # Pad activations only when necessary.
        xc = x.astype(self.compute_dtype)
        if (Mp, Kp) == (B, In):
            xp = xc
        else:
            xp = jnp.zeros((Mp, Kp), self.compute_dtype).at[:B, :In].set(xc)

        n_k = Kp // tk
        if n_k == 1:
            # Specialized single-K-step path: no accumulator init/finalize.
            kernel = functools.partial(_eq_linear_kernel_single_k, scale=self.scale)
            grid = (Mp // tm, Np // tn)
            in_specs = [
                pl.BlockSpec((tm, Kp), lambda i, j: (i, 0)),   # x
                pl.BlockSpec((tn, Kp), lambda i, j: (j, 0)),   # weight (Out, In)
                pl.BlockSpec((1, tn), lambda i, j: (0, j)),    # bias
            ]
            out_specs = pl.BlockSpec((tm, tn), lambda i, j: (i, j))
            dims = ("parallel", "parallel")
            out_dt = out_dtype
        else:
            kernel = functools.partial(_eq_linear_kernel_multi_k, scale=self.scale)
            grid = (Mp // tm, Np // tn, n_k)
            in_specs = [
                pl.BlockSpec((tm, tk), lambda i, j, k: (i, k)),   # x
                pl.BlockSpec((tn, tk), lambda i, j, k: (j, k)),   # weight (Out, In)
                pl.BlockSpec((1, tn), lambda i, j, k: (0, j)),    # bias
            ]
            out_specs = pl.BlockSpec((tm, tn), lambda i, j, k: (i, j))
            dims = ("parallel", "parallel", "arbitrary")
            out_dt = jnp.float32  # output tile doubles as the f32 accumulator

        out_p = pl.pallas_call(
            kernel,
            out_shape=jax.ShapeDtypeStruct((Mp, Np), out_dt),
            grid_spec=pltpu.PrefetchScalarGridSpec(
                num_scalar_prefetch=0,
                grid=grid,
                in_specs=in_specs,
                out_specs=out_specs,
            ),
            compiler_params=pltpu.CompilerParams(
                dimension_semantics=dims,
                vmem_limit_bytes=budget,
            ),
        )(xp, self.wp, self.bp)

        out = out_p[:B, :Out]
        if out.dtype != out_dtype:
            out = out.astype(out_dtype)
        return out


def equalized_linear(x, weight, bias, *, use_bf16=True):
    """One-off convenience wrapper (parameter prep NOT amortized across calls)."""
    return EqualizedLinearTPU(weight, bias, use_bf16=use_bf16)(x)


if __name__ == "__main__":
    key = jax.random.PRNGKey(0)
    k_x, k_w, k_x2, k_w2 = jax.random.split(key, 4)

    # --- small demo matching the PyTorch module (single-K fast path) ---
    batch, in_features, out_features = 8, 32, 64
    bias_init = 0.0  # matches EqualizedLinear default bias=0.0

    x = jax.random.normal(k_x, (batch, in_features), dtype=jnp.float32)
    weight = jax.random.normal(k_w, (out_features, in_features), dtype=jnp.float32)
    bias = jnp.ones((out_features,), dtype=jnp.float32) * bias_init

    layer = EqualizedLinearTPU(weight, bias)          # one-time param prep
    y = jax.block_until_ready(layer(x))

    scale = 1.0 / math.sqrt(in_features)
    y_ref = jnp.dot(x, (weight * scale).T, precision=lax.Precision.HIGHEST) + bias
    assert y.shape == (batch, out_features)
    err = float(jnp.max(jnp.abs(y - y_ref)))
    assert jnp.allclose(y, y_ref, atol=5e-2, rtol=5e-2), f"max abs err = {err}"

    # --- exercise the multi-K accumulation path (small In split into 2 K steps) ---
    b2, in2, out2 = 16, 256, 64
    x2 = jax.random.normal(k_x2, (b2, in2), dtype=jnp.float32)
    w2 = jax.random.normal(k_w2, (out2, in2), dtype=jnp.float32)
    b2v = jnp.full((out2,), 0.1, dtype=jnp.float32)
    layer2 = EqualizedLinearTPU(w2, b2v, tk_max=128)  # forces Kp//tk == 2
    y2 = jax.block_until_ready(layer2(x2))
    y2_ref = jnp.dot(x2, (w2 / math.sqrt(in2)).T, precision=lax.Precision.HIGHEST) + b2v
    err2 = float(jnp.max(jnp.abs(y2 - y2_ref)))
    assert jnp.allclose(y2, y2_ref, atol=5e-2, rtol=5e-2), f"max abs err = {err2}"

    print("KERNEL_OK")
</pallas_src>

<mosaic_0001>
module attributes {stable_mosaic.version = 11 : i64} {
  func.func @_eq_linear_kernel_single_k(%arg0: i32, %arg1: i32, %arg2: memref<8x128xbf16, #tpu.memory_space<vmem>>, %arg3: memref<128x128xbf16, #tpu.memory_space<vmem>>, %arg4: memref<1x128xf32, #tpu.memory_space<vmem>>, %arg5: memref<8x128xf32, #tpu.memory_space<vmem>>) attributes {dimension_semantics = [#tpu.dimension_semantics<parallel>, #tpu.dimension_semantics<parallel>], iteration_bounds = array<i64: 1, 1>, scalar_prefetch = 0 : i64, scratch_operands = 0 : i64, tpu.core_type = #tpu.core_type<tc>, window_params = [{transform_indices = @transform_0, window_bounds = array<i64: 8, 128>}, {transform_indices = @transform_1, window_bounds = array<i64: 128, 128>}, {transform_indices = @transform_2, window_bounds = array<i64: 1, 128>}, {transform_indices = @transform_3, window_bounds = array<i64: 8, 128>}]} {
    %c0 = arith.constant 0 : index
    %c0_0 = arith.constant 0 : index
    %0 = vector.load %arg2[%c0, %c0_0] : memref<8x128xbf16, #tpu.memory_space<vmem>>, vector<8x128xbf16>
    %c0_1 = arith.constant 0 : index
    %c0_2 = arith.constant 0 : index
    %1 = vector.load %arg3[%c0_1, %c0_2] : memref<128x128xbf16, #tpu.memory_space<vmem>>, vector<128x128xbf16>
    %cst = arith.constant dense<0.000000e+00> : vector<8x128xf32>
    %2 = tpu.matmul %0, %1, %cst {dimension_numbers = #tpu.dot_dimension_numbers<[1], [1], [0], [0], [0, 0, 1, 0], [], []>} : vector<8x128xbf16>, vector<128x128xbf16>, vector<8x128xf32> -> vector<8x128xf32>
    %cst_3 = arith.constant 0.176776692 : f32
    %3 = vector.broadcast %cst_3 : f32 to vector<8x128xf32>
    %4 = arith.mulf %2, %3 : vector<8x128xf32>
    %c0_4 = arith.constant 0 : index
    %c0_5 = arith.constant 0 : index
    %5 = vector.load %arg4[%c0_4, %c0_5] : memref<1x128xf32, #tpu.memory_space<vmem>>, vector<1x128xf32>
    %6 = vector.broadcast %5 : vector<1x128xf32> to vector<8x128xf32>
    %7 = arith.addf %4, %6 : vector<8x128xf32>
    %c0_6 = arith.constant 0 : index
    %c0_7 = arith.constant 0 : index
    %8 = vector.load %arg5[%c0_6, %c0_7] : memref<8x128xf32, #tpu.memory_space<vmem>>, vector<8x128xf32>
    tpu.vector_store %arg5[%c0_6, %c0_7], %7 {strides = array<i32>} : memref<8x128xf32, #tpu.memory_space<vmem>>, vector<8x128xf32>,
    return
  }
  func.func @transform_0(%arg0: i32, %arg1: i32) -> (i32, i32) {
    %c0_i32 = arith.constant 0 : i32
    %c0_i32_0 = arith.constant 0 : i32
    return %arg0, %c0_i32 : i32, i32
  }
  func.func @transform_1(%arg0: i32, %arg1: i32) -> (i32, i32) {
    %c0_i32 = arith.constant 0 : i32
    %c0_i32_0 = arith.constant 0 : i32
    return %arg1, %c0_i32 : i32, i32
  }
  func.func @transform_2(%arg0: i32, %arg1: i32) -> (i32, i32) {
    %c0_i32 = arith.constant 0 : i32
    %c0_i32_0 = arith.constant 0 : i32
    return %c0_i32, %arg1 : i32, i32
  }
  func.func @transform_3(%arg0: i32, %arg1: i32) -> (i32, i32) {
    %c0_i32 = arith.constant 0 : i32
    return %arg0, %arg1 : i32, i32
  }
}

</mosaic_0001>

<llo_original>
// kernel: tpu_custom_call.1
$region0: #{tpu_custom_call.1}
  #allocation0 [shape = 'u32[]', space=smem, size = 0x4, offset = 0x4, fixed_abs, tag = 'smem constant byte address 0x4 - core index']
  #allocation1 [shape = 'u32[144,128]{1,0:T(1,128)}', space=vmem, size = 0x12000, scoped, tag = 'internal scratch']
  %s0 = inlined_call_operand.hbm [shape: bf16[8,128], index: 0, kind: input, shape index: {}]
  %s1 = inlined_call_operand.hbm [shape: bf16[128,128], index: 1, kind: input, shape index: {}]
  %s2 = inlined_call_operand.vmem [shape: f32[1,128], index: 2, kind: input, shape index: {}]
  %s3 = inlined_call_operand.hbm [shape: f32[8,128], index: 3, kind: output, shape index: {}]
  %s4 = sld [smem:[#allocation0]]
  $region30: #{tpu_custom_call.1} parent=0
    _
  %s6 = ssub.s32 1, %s4
  %s7 = scalar_select 0, %s6, %s4
  $region1: #{tpu_custom_call.1} parent=0
    #allocation2 [shape = 'u8[2048]{0}', space=vmem, size = 0x800, scoped, tag = 'input window, operand 0, single buffered']
    #allocation3 [shape = 's32[1]{0}', space=sflag, size = 0x4, scoped, tag = 'scoped memory for tpu_custom_call.1']
    #allocation4 [shape = 's32[1]{0}', space=sflag, size = 0x4, scoped, tag = 'scoped memory for tpu_custom_call.1']
    #allocation5 [shape = 'u8[32768]{0}', space=vmem, size = 0x8000, scoped, tag = 'input window, operand 1, single buffered']
    #allocation6 [shape = 's32[1]{0}', space=sflag, size = 0x4, scoped, tag = 'scoped memory for tpu_custom_call.1']
    #allocation7 [shape = 'u8[4096]{0}', space=vmem, size = 0x1000, scoped, tag = 'output window, operand 0, single buffered']
    %8 = vsyncpa [#allocation3], 0
    %9 = vsyncpa [#allocation6], 0
    %10 = vsyncpa [#allocation4], 0
    // Predicated region
    $region2: #{tpu_custom_call.1} parent=1 // pred_check
      _
    $region3: #{tpu_custom_call.1} parent=1 // pred_check_branch
      %12 = sbr.rel (0) target = $region5
    $region4: #{tpu_custom_call.1} parent=1 // pred_region
      %s14 = ssub.s32 64, 64
      %15 = vsyncadd [#allocation3], %s14
      %s17 = sshll.u32 [#allocation2], 4
      %s18 = int_to_ptr.vmem [resolvable:$true] %s17
      %20 = dma.hbm_to_vmem [thread:$0]  %s0, 64, %s18, [#allocation3]
    $region5: #{tpu_custom_call.1} parent=1 // pred_fallthru
      _
    // Predicated region
    $region6: #{tpu_custom_call.1} parent=1 // pred_check
      _
    $region7: #{tpu_custom_call.1} parent=1 // pred_check_branch
      %22 = sbr.rel (0) target = $region9
    $region8: #{tpu_custom_call.1} parent=1 // pred_region
      %s24 = ssub.s32 1024, 1024
      %25 = vsyncadd [#allocation6], %s24
      %s26 = sshll.u32 [#allocation5], 4
      %s27 = int_to_ptr.vmem [resolvable:$true] %s26
      %32 = dma.hbm_to_vmem [thread:$0]  %s1, 1024, %s27, [#allocation6], 64, 64, 4
    $region9: #{tpu_custom_call.1} parent=1 // pred_fallthru
      _
    // Predicated region
    $region10: #{tpu_custom_call.1} parent=1 // pred_check
      _
    $region11: #{tpu_custom_call.1} parent=1 // pred_check_branch
      %34 = sbr.rel (0) target = $region13
    $region12: #{tpu_custom_call.1} parent=1 // pred_region
      _
    $region13: #{tpu_custom_call.1} parent=1 // pred_fallthru
      _
    // Predicated region
    $region14: #{tpu_custom_call.1} parent=1 // pred_check
      _
    $region15: #{tpu_custom_call.1} parent=1 // pred_check_branch
      %36 = sbr.rel (0) target = $region17
    $region16: #{tpu_custom_call.1} parent=1 // pred_region
      %37 = dma.done [#allocation3], 64
    $region17: #{tpu_custom_call.1} parent=1 // pred_fallthru
      _
    // Predicated region
    $region18: #{tpu_custom_call.1} parent=1 // pred_check
      _
    $region19: #{tpu_custom_call.1} parent=1 // pred_check_branch
      %39 = sbr.rel (0) target = $region21
    $region20: #{tpu_custom_call.1} parent=1 // pred_region
      %40 = dma.done [#allocation6], 1024
    $region21: #{tpu_custom_call.1} parent=1 // pred_fallthru
      _
    %v42 = vld [vmem:[#allocation2] sm:$0xf]
    %v43 = vld [vmem:[#allocation5] sm:$0xf]
    %v44 = vld [vmem:[#allocation5 + $0x4] sm:$0xf]
    %v45 = vld [vmem:[#allocation5 + $0x8] sm:$0xf]
    %v46 = vld [vmem:[#allocation5 + $0xc] sm:$0xf]
    %v47 = vld [vmem:[#allocation5 + $0x10] sm:$0xf]
    %v48 = vld [vmem:[#allocation5 + $0x14] sm:$0xf]
    %v49 = vld [vmem:[#allocation5 + $0x18] sm:$0xf]
    %v50 = vld [vmem:[#allocation5 + $0x1c] sm:$0xf]
    %v51 = vld [vmem:[#allocation5 + $0x20] sm:$0xf]
    %v52 = vld [vmem:[#allocation5 + $0x24] sm:$0xf]
    %v53 = vld [vmem:[#allocation5 + $0x28] sm:$0xf]
    %v54 = vld [vmem:[#allocation5 + $0x2c] sm:$0xf]
    %v55 = vld [vmem:[#allocation5 + $0x30] sm:$0xf]
    %v56 = vld [vmem:[#allocation5 + $0x34] sm:$0xf]
    %v57 = vld [vmem:[#allocation5 + $0x38] sm:$0xf]
    %v58 = vld [vmem:[#allocation5 + $0x3c] sm:$0xf]
    %v75 = vunpack.c.l.b16 %v43
    %v76 = vunpack.c.l.b16 %v44
    %v77 = vunpack.c.l.b16 %v45
    %v78 = vunpack.c.l.b16 %v46
    %v79 = vunpack.c.l.b16 %v47
    %v80 = vunpack.c.l.b16 %v48
    %v81 = vunpack.c.l.b16 %v49
    %v82 = vunpack.c.l.b16 %v50
    %v83 = vunpack.c.l.b16 %v51
    %v84 = vunpack.c.l.b16 %v52
    %v85 = vunpack.c.l.b16 %v53
    %v86 = vunpack.c.l.b16 %v54
    %v87 = vunpack.c.l.b16 %v55
    %v88 = vunpack.c.l.b16 %v56
    %v89 = vunpack.c.l.b16 %v57
    %v90 = vunpack.c.l.b16 %v58
    %v91 = vpack.c.b16 %v76, %v75
    %v92 = vpack.c.b16 %v78, %v77
    %v93 = vpack.c.b16 %v80, %v79
    %v94 = vpack.c.b16 %v82, %v81
    %v95 = vpack.c.b16 %v84, %v83
    %v96 = vpack.c.b16 %v86, %v85
    %v97 = vpack.c.b16 %v88, %v87
    %v98 = vpack.c.b16 %v90, %v89
    %107 = vmatprep.subr.bf16.mxu0 0
    %108 = vmatpush1.bf16.xpose.msra.mxu0 %v91
    %109 = vmatprep.subr.bf16.mxu0 0
    %110 = vmatpush1.bf16.xpose.msra.mxu0 %v92
    %111 = vmatprep.subr.bf16.mxu0 0
    %112 = vmatpush1.bf16.xpose.msra.mxu0 %v93
    %113 = vmatprep.subr.bf16.mxu0 0
    %114 = vmatpush1.bf16.xpose.msra.mxu0 %v94
    %115 = vmatprep.subr.bf16.mxu0 0
    %116 = vmatpush1.bf16.xpose.msra.mxu0 %v95
    %117 = vmatprep.subr.bf16.mxu0 0
    %118 = vmatpush1.bf16.xpose.msra.mxu0 %v96
    %119 = vmatprep.subr.bf16.mxu0 0
    %120 = vmatpush1.bf16.xpose.msra.mxu0 %v97
    %121 = vmatprep.subr.bf16.mxu0 0
    %122 = vmatpush1.bf16.xpose.msra.mxu0 %v98
    %123 = vmatprep.subr.bf16.mxu0 0
    %124 = vmatpush1.bf16.xpose.msra.mxu0 0
    %125 = vmatprep.subr.bf16.mxu0 0
    %126 = vmatpush1.bf16.xpose.msra.mxu0 0
    %127 = vmatprep.subr.bf16.mxu0 0
    %128 = vmatpush1.bf16.xpose.msra.mxu0 0
    %129 = vmatprep.subr.bf16.mxu0 0
    %130 = vmatpush1.bf16.xpose.msra.mxu0 0
    %131 = vmatprep.subr.bf16.mxu0 0
    %132 = vmatpush1.bf16.xpose.msra.mxu0 0
    %133 = vmatprep.subr.bf16.mxu0 0
    %134 = vmatpush1.bf16.xpose.msra.mxu0 0
    %135 = vmatprep.subr.bf16.mxu0 0
    %136 = vmatpush1.bf16.xpose.msra.mxu0 0
    %137 = vmatprep.subr.bf16.mxu0 0
    %138 = vmatpush1.bf16.xpose.msra.mxu0 0
    %139 = vmatprep.mubr.bf16.mxu0 0
    %140 = vmatmul.mubr.bf16.gmra.mrb[0].mxu0 %v42
    %v141 = vpop.f32.mrb[0].mxu0
    %v142 = vadd.f32 0.0, %v141
    %v143 = vpop.f32.mrb[0].mxu0
    %v144 = vpop.f32.mrb[0].mxu0
    %v145 = vpop.f32.mrb[0].mxu0
    %146 = vdwg.mxu0
    %v147 = vmul.f32 %v142, 0.17677669
    %v148 = vld [vmem:[%s2] sm:$0x1]
    %v150 = vlaneseq
    %v151 = vshrl.u32 %v150, 7
    %v152 = vsub.s32 0, %v151
    %v153 = vrot.slane %v148, %v152
    %v155 = vadd.f32 %v147, %v153
    %156 = vst [vmem:[#allocation7] sm:$0xff] %v155
    // Predicated region
    $region22: #{tpu_custom_call.1} parent=1 // pred_check
      _
    $region23: #{tpu_custom_call.1} parent=1 // pred_check_branch
      %158 = sbr.rel (0) target = $region25
    $region24: #{tpu_custom_call.1} parent=1 // pred_region
      %s160 = ssub.s32 128, 128
      %161 = vsyncadd [#allocation4], %s160
      %s163 = sshll.u32 [#allocation7], 4
      %s164 = int_to_ptr.vmem [resolvable:$true] %s163
      %166 = dma.vmem_to_hbm [thread:$0]  %s164, 128, %s3, [#allocation4]
    $region25: #{tpu_custom_call.1} parent=1 // pred_fallthru
      _
    // Predicated region
    $region26: #{tpu_custom_call.1} parent=1 // pred_check
      _
    $region27: #{tpu_custom_call.1} parent=1 // pred_check_branch
      %168 = sbr.rel (0) target = $region29
    $region28: #{tpu_custom_call.1} parent=1 // pred_region
      %169 = dma.done [#allocation4], 128
    $region29: #{tpu_custom_call.1} parent=1 // pred_fallthru
      _
    %170 = vsyncpa [#allocation3], 1
    %171 = vsyncpa [#allocation6], 1
    %172 = vsyncpa [#allocation4], 1

</llo_original>
